<compile_context>
chip_gen: v7x
topology: tpu7x:2x2x1
jax: 0.10.0
libtpu: 0.0.40
codegen_flags: <defaults>
</compile_context>

<pallas_src>
import jax
import jax.numpy as jnp
from jax.experimental import pallas as pl
from jax.experimental.pallas import tpu as pltpu

LANE = 128      # vreg lane width
SUBLANE = 8     # vreg sublane count (f32)


def scale_shift_kernel(w_ref, b_ref, x_ref, o_ref):
    # w_ref, b_ref: SMEM scalars (shape (1,)).  x_ref/o_ref: (TM, 128) f32.
    # Pure VPU broadcast fma: y = x * w + b.  No MXU involvement.
    o_ref[...] = x_ref[...] * w_ref[0] + b_ref[0]


def linear_forward(x, weight, bias, *, tile_rows=512):
    """Pallas equivalent of torch.nn.Linear(1, 1) forward.

    x:      (B, 1) float32
    weight: (1, 1) float32  (PyTorch layout: (out_features, in_features))
    bias:   (1,)   float32
    returns (B, 1) float32 with y = x @ W^T + b
    """
    batch, in_f = x.shape
    out_f = weight.shape[0]
    assert in_f == 1 and out_f == 1, "Model is nn.Linear(1, 1)"

    n = batch  # total scalar elements (in_features == 1)

    # --- lane-dense repacking: (B, 1) -> (rows, 128), padded ---------------
    rows = pl.cdiv(n, LANE)
    rows = max(SUBLANE, ((rows + SUBLANE - 1) // SUBLANE) * SUBLANE)
    tm = min(tile_rows, rows)
    rows = ((rows + tm - 1) // tm) * tm          # rows is a multiple of tm
    padded = rows * LANE

    flat = jnp.pad(x.reshape(-1).astype(jnp.float32), (0, padded - n))
    x2d = flat.reshape(rows, LANE)

    # SMEM scalar parameters (no VMEM tiles, no transposes/reshapes to DMA).
    w_s = weight.reshape(1).astype(jnp.float32)
    b_s = bias.reshape(1).astype(jnp.float32)

    out2d = pl.pallas_call(
        scale_shift_kernel,
        out_shape=jax.ShapeDtypeStruct((rows, LANE), jnp.float32),
        grid_spec=pltpu.PrefetchScalarGridSpec(
            num_scalar_prefetch=2,                     # w_s, b_s -> SMEM
            grid=(rows // tm,),
            in_specs=[pl.BlockSpec((tm, LANE), lambda i, w, b: (i, 0))],
            out_specs=pl.BlockSpec((tm, LANE), lambda i, w, b: (i, 0)),
        ),
        compiler_params=pltpu.CompilerParams(
            dimension_semantics=("parallel",),         # megacore / v7x 2-TC split
        ),
    )(w_s, b_s, x2d)

    # Drop padding, restore (B, 1) layout.
    return out2d.reshape(-1)[:n].reshape(batch, out_f)


if __name__ == "__main__":
    # Deterministic parameter init (shapes from nn.Linear(1, 1)).
    key = jax.random.PRNGKey(0)
    kw, kb = jax.random.split(key)
    weight = jax.random.uniform(kw, (1, 1), jnp.float32, minval=-1.0, maxval=1.0)
    bias = jax.random.uniform(kb, (1,), jnp.float32, minval=-1.0, maxval=1.0)

    # Same input as the reference script: hour_var = tensor([[4.0]]) -> (1, 1).
    x = jnp.array([[4.0]], dtype=jnp.float32)
    y_pred = jax.block_until_ready(linear_forward(x, weight, bias))
    y_ref = x @ weight.T + bias
    assert y_pred.shape == (1, 1)
    assert jnp.allclose(y_pred, y_ref, atol=1e-5, rtol=1e-5), (y_pred, y_ref)

    # Small-batch check to exercise the lane-dense padding / slicing path.
    xb = jnp.arange(1.0, 6.0, dtype=jnp.float32).reshape(5, 1)
    yb = jax.block_until_ready(linear_forward(xb, weight, bias))
    yb_ref = xb @ weight.T + bias
    assert yb.shape == (5, 1)
    assert jnp.allclose(yb, yb_ref, atol=1e-5, rtol=1e-5), (yb, yb_ref)

    # NOTE: for a literal (1,1) inference the plain jnp expression is strictly
    # faster than any kernel launch; the Pallas path is here to demonstrate the
    # scalable lane-dense formulation for large batches.
    print("KERNEL_OK")
</pallas_src>

<mosaic_0001>
module attributes {stable_mosaic.version = 11 : i64} {
  func.func @scale_shift_kernel(%arg0: i32, %arg1: memref<1xf32, #tpu.memory_space<smem>>, %arg2: memref<1xf32, #tpu.memory_space<smem>>, %arg3: memref<8x128xf32, #tpu.memory_space<vmem>>, %arg4: memref<8x128xf32, #tpu.memory_space<vmem>>) attributes {dimension_semantics = [#tpu.dimension_semantics<parallel>], iteration_bounds = array<i64: 1>, scalar_prefetch = 2 : i64, scratch_operands = 0 : i64, tpu.core_type = #tpu.core_type<tc>, window_params = [{transform_indices = @transform_0, window_bounds = array<i64: 8, 128>}, {transform_indices = @transform_1, window_bounds = array<i64: 8, 128>}]} {
    %c0 = arith.constant 0 : index
    %c0_0 = arith.constant 0 : index
    %0 = vector.load %arg3[%c0, %c0_0] : memref<8x128xf32, #tpu.memory_space<vmem>>, vector<8x128xf32>
    %c0_1 = arith.constant 0 : index
    %1 = memref.load %arg1[%c0_1] : memref<1xf32, #tpu.memory_space<smem>>
    %2 = vector.broadcast %1 : f32 to vector<8x128xf32>
    %3 = arith.mulf %0, %2 : vector<8x128xf32>
    %c0_2 = arith.constant 0 : index
    %4 = memref.load %arg2[%c0_2] : memref<1xf32, #tpu.memory_space<smem>>
    %5 = vector.broadcast %4 : f32 to vector<8x128xf32>
    %6 = arith.addf %3, %5 : vector<8x128xf32>
    %c0_3 = arith.constant 0 : index
    %c0_4 = arith.constant 0 : index
    %7 = vector.load %arg4[%c0_3, %c0_4] : memref<8x128xf32, #tpu.memory_space<vmem>>, vector<8x128xf32>
    tpu.vector_store %arg4[%c0_3, %c0_4], %6 {strides = array<i32>} : memref<8x128xf32, #tpu.memory_space<vmem>>, vector<8x128xf32>,
    return
  }
  func.func @transform_0(%arg0: i32, %arg1: memref<1xf32, #tpu.memory_space<smem>>, %arg2: memref<1xf32, #tpu.memory_space<smem>>) -> (i32, i32) {
    %c0_i32 = arith.constant 0 : i32
    %c0_i32_0 = arith.constant 0 : i32
    return %arg0, %c0_i32 : i32, i32
  }
  func.func @transform_1(%arg0: i32, %arg1: memref<1xf32, #tpu.memory_space<smem>>, %arg2: memref<1xf32, #tpu.memory_space<smem>>) -> (i32, i32) {
    %c0_i32 = arith.constant 0 : i32
    %c0_i32_0 = arith.constant 0 : i32
    return %arg0, %c0_i32 : i32, i32
  }
}

</mosaic_0001>

<llo_original>
// kernel: tpu_custom_call.1
$region0: #{tpu_custom_call.1}
  #allocation0 [shape = 'u32[]', space=smem, size = 0x4, offset = 0x4, fixed_abs, tag = 'smem constant byte address 0x4 - core index']
  #allocation1 [shape = 'u32[144,128]{1,0:T(1,128)}', space=vmem, size = 0x12000, scoped, tag = 'internal scratch']
  #allocation2 [shape = 's32[1]{0}', space=sflag, size = 0x4, scoped, tag = 'scoped memory for tpu_custom_call.1']
  #allocation3 [shape = 'f32[1]{0:T(128)S(6)}', space=smem, size = 0x200, scoped, tag = 'prefetched SMEM operand 0']
  #allocation4 [shape = 'f32[1]{0:T(128)S(6)}', space=smem, size = 0x200, scoped, tag = 'prefetched SMEM operand 1']
  %s0 = inlined_call_operand.<no memory space> [shape: f32[1], index: 0, kind: input, shape index: {}]
  %s1 = inlined_call_operand.<no memory space> [shape: f32[1], index: 1, kind: input, shape index: {}]
  %s2 = inlined_call_operand.hbm [shape: f32[8,128], index: 2, kind: input, shape index: {}]
  %s3 = inlined_call_operand.hbm [shape: f32[8,128], index: 3, kind: output, shape index: {}]
  %s4 = sld [smem:[#allocation0]]
  $region18: #{tpu_custom_call.1} parent=0
    _
  %s6 = ssub.s32 1, %s4
  %s7 = scalar_select 0, %s6, %s4
  %8 = sst [smem:[#allocation3]] %s0
  %9 = sst [smem:[#allocation4]] %s1
  $region1: #{tpu_custom_call.1} parent=0
    #allocation5 [shape = 'u8[4096]{0}', space=vmem, size = 0x1000, scoped, tag = 'input window, operand 2, single buffered']
    #allocation6 [shape = 's32[1]{0}', space=sflag, size = 0x4, scoped, tag = 'scoped memory for tpu_custom_call.1']
    #allocation7 [shape = 's32[1]{0}', space=sflag, size = 0x4, scoped, tag = 'scoped memory for tpu_custom_call.1']
    #allocation8 [shape = 'u8[4096]{0}', space=vmem, size = 0x1000, scoped, tag = 'output window, operand 0, single buffered']
    %10 = vsyncpa [#allocation6], 0
    %11 = vsyncpa [#allocation7], 0
    // Predicated region
    $region2: #{tpu_custom_call.1} parent=1 // pred_check
      _
    $region3: #{tpu_custom_call.1} parent=1 // pred_check_branch
      %13 = sbr.rel (0) target = $region5
    $region4: #{tpu_custom_call.1} parent=1 // pred_region
      %s15 = ssub.s32 128, 128
      %16 = vsyncadd [#allocation6], %s15
      %s18 = sshll.u32 [#allocation5], 4
      %s19 = int_to_ptr.vmem [resolvable:$true] %s18
      %21 = dma.hbm_to_vmem [thread:$0]  %s2, 128, %s19, [#allocation6]
    $region5: #{tpu_custom_call.1} parent=1 // pred_fallthru
      _
    // Predicated region
    $region6: #{tpu_custom_call.1} parent=1 // pred_check
      _
    $region7: #{tpu_custom_call.1} parent=1 // pred_check_branch
      %23 = sbr.rel (0) target = $region9
    $region8: #{tpu_custom_call.1} parent=1 // pred_region
      %24 = dma.done [#allocation6], 128
    $region9: #{tpu_custom_call.1} parent=1 // pred_fallthru
      _
    %v25 = vld [vmem:[#allocation5] sm:$0xff]
    %s26 = sld [smem:[#allocation3]]
    %v27 = vstv %s26
    %v28 = vmul.f32 %v25, %v27
    %s29 = sld [smem:[#allocation4]]
    %v30 = vstv %s29
    %v31 = vadd.f32 %v28, %v30
    %32 = vst [vmem:[#allocation8] sm:$0xff] %v31
    // Predicated region
    $region10: #{tpu_custom_call.1} parent=1 // pred_check
      _
    $region11: #{tpu_custom_call.1} parent=1 // pred_check_branch
      %34 = sbr.rel (0) target = $region13
    $region12: #{tpu_custom_call.1} parent=1 // pred_region
      %s36 = ssub.s32 128, 128
      %37 = vsyncadd [#allocation7], %s36
      %s39 = sshll.u32 [#allocation8], 4
      %s40 = int_to_ptr.vmem [resolvable:$true] %s39
      %42 = dma.vmem_to_hbm [thread:$0]  %s40, 128, %s3, [#allocation7]
    $region13: #{tpu_custom_call.1} parent=1 // pred_fallthru
      _
    // Predicated region
    $region14: #{tpu_custom_call.1} parent=1 // pred_check
      _
    $region15: #{tpu_custom_call.1} parent=1 // pred_check_branch
      %44 = sbr.rel (0) target = $region17
    $region16: #{tpu_custom_call.1} parent=1 // pred_region
      %45 = dma.done [#allocation7], 128
    $region17: #{tpu_custom_call.1} parent=1 // pred_fallthru
      _
    %46 = vsyncpa [#allocation6], 1
    %47 = vsyncpa [#allocation7], 1

</llo_original>
